<compile_context>
chip_gen: v7x
topology: tpu7x:2x2x1
jax: 0.10.0
libtpu: 0.0.40
codegen_flags: <defaults>
</compile_context>

<pallas_src>
import jax
import jax.numpy as jnp
from jax.experimental import pallas as pl
from jax.experimental.pallas import tpu as pltpu

BN_EPS = 1e-5
LANE = 128
CH_ALIGN = 16                          # channel padding multiple (bf16 packing)
VMEM_LIMIT_BYTES = 48 * 1024 * 1024    # under v7x's 64 MiB physical VMEM


def _round_up(x, m):
    return (x + m - 1) // m * m


def _pick_tile(n_pad, target):
    """Largest multiple of 128 that divides n_pad and is <= target."""
    t = max(LANE, min((max(target, LANE) // LANE) * LANE, n_pad))
    while n_pad % t:
        t -= LANE
    return t


def _make_layer_kernel(n_in, first_layer, need_mask, n_valid, tm, nt_ps, nsplit):
    """Fused (prev-BN+ReLU) -> 1x1 conv -> stats-accumulate kernel body.

    Ref order: x_refs[n_in], (prev_scale, prev_shift if not first layer),
               w_refs[n_in], y_ref, stats_ref, sum_acc, sq_acc
    """

    def kernel(*refs):
        i = 0
        x_refs = refs[i:i + n_in]; i += n_in
        if first_layer:
            scale_ref = shift_ref = None
        else:
            scale_ref, shift_ref = refs[i], refs[i + 1]; i += 2
        w_refs = refs[i:i + n_in]; i += n_in
        y_ref, stats_ref, sum_acc, sq_acc = refs[i:i + 4]

        si = pl.program_id(0)          # N-split (parallel)
        j = pl.program_id(2)           # N-tile within split (arbitrary)

        @pl.when(j == 0)
        def _init():
            sum_acc[...] = jnp.zeros_like(sum_acc)
            sq_acc[...] = jnp.zeros_like(sq_acc)

        y = None
        for x_ref, w_ref in zip(x_refs, w_refs):
            if first_layer:
                xb = x_ref[...].astype(jnp.bfloat16)
            else:
                # previous layer's BatchNorm folded to scale/shift + ReLU (f32)
                xf = x_ref[...].astype(jnp.float32)
                xf = jnp.maximum(xf * scale_ref[...] + shift_ref[...], 0.0)
                xb = xf.astype(jnp.bfloat16)
            part = jnp.dot(w_ref[...], xb, preferred_element_type=jnp.float32)
            y = part if y is None else y + part

        # bf16 intermediate (halves HBM traffic); stats come from the f32 acc.
        y_ref[...] = y.astype(y_ref.dtype)

        def _accumulate(yv):
            # lane-wide accumulation: VPU adds only; cross-lane reduce at flush
            s = q = None
            for kk in range(tm // LANE):
                blk = yv[:, kk * LANE:(kk + 1) * LANE]
                s = blk if s is None else s + blk
                q = blk * blk if q is None else q + blk * blk
            sum_acc[...] += s
            sq_acc[...] += q

        if need_mask:
            # padding lives only in the last tile of the last split
            is_pad_tile = jnp.logical_and(si == nsplit - 1, j == nt_ps - 1)

            @pl.when(jnp.logical_not(is_pad_tile))
            def _acc_plain():
                _accumulate(y)

            @pl.when(is_pad_tile)
            def _acc_masked():
                col = (jax.lax.broadcasted_iota(jnp.int32, y.shape, 1)
                       + (si * nt_ps + j) * tm)
                _accumulate(jnp.where(col < n_valid, y, 0.0))
        else:
            _accumulate(y)

        @pl.when(j == nt_ps - 1)
        def _flush():
            stats_ref[:, 0:1] = jnp.sum(sum_acc[...], axis=1, keepdims=True)
            stats_ref[:, 1:2] = jnp.sum(sq_acc[...], axis=1, keepdims=True)

    return kernel


def _layer_call(xs, ws, prev_scale, prev_shift, cout_p, n_valid, tm, nsplit,
                first_layer):
    b = xs[0].shape[0]
    n_pad = xs[0].shape[2]
    nt = n_pad // tm
    nt_ps = nt // nsplit
    need_mask = (not first_layer) and (n_valid != n_pad)

    in_specs, args = [], []
    for x in xs:
        ci = x.shape[1]
        in_specs.append(pl.BlockSpec(
            (None, ci, tm), lambda si, bi, ji: (bi, 0, si * nt_ps + ji)))
        args.append(x)
    if not first_layer:
        cin_p = xs[0].shape[1]
        for s in (prev_scale, prev_shift):
            in_specs.append(pl.BlockSpec((cin_p, 1), lambda si, bi, ji: (0, 0)))
            args.append(s)
    for w in ws:
        in_specs.append(pl.BlockSpec(w.shape, lambda si, bi, ji: (0, 0)))
        args.append(w)

    out_shape = (
        jax.ShapeDtypeStruct((b, cout_p, n_pad), jnp.bfloat16),     # raw conv out
        jax.ShapeDtypeStruct((nsplit, b, cout_p, 2), jnp.float32),  # sum / sumsq
    )
    out_specs = (
        pl.BlockSpec((None, cout_p, tm),
                     lambda si, bi, ji: (bi, 0, si * nt_ps + ji)),
        pl.BlockSpec((None, None, cout_p, 2),
                     lambda si, bi, ji: (si, bi, 0, 0)),
    )

    kernel = _make_layer_kernel(len(xs), first_layer, need_mask, n_valid,
                                tm, nt_ps, nsplit)
    return pl.pallas_call(
        kernel,
        grid=(nsplit, b, nt_ps),
        in_specs=in_specs,
        out_specs=out_specs,
        out_shape=out_shape,
        scratch_shapes=[pltpu.VMEM((cout_p, LANE), jnp.float32),
                        pltpu.VMEM((cout_p, LANE), jnp.float32)],
        compiler_params=pltpu.CompilerParams(
            dimension_semantics=("parallel", "parallel", "arbitrary"),
            vmem_limit_bytes=VMEM_LIMIT_BYTES),
    )(*args)


def _make_finalize_kernel(cout_p, cout_last):
    def kernel(y_ref, scale_ref, shift_ref, o_ref):
        if cout_last == cout_p:
            y = y_ref[...].astype(jnp.float32)
        else:
            y = y_ref[0:cout_last, :].astype(jnp.float32)
        o_ref[...] = jnp.maximum(y * scale_ref[...] + shift_ref[...], 0.0)
    return kernel


def _finalize_call(y_raw, scale, shift, tm, cout_last):
    b, cout_p, n_pad = y_raw.shape
    nt = n_pad // tm
    return pl.pallas_call(
        _make_finalize_kernel(cout_p, cout_last),
        grid=(b, nt),
        in_specs=[
            pl.BlockSpec((None, cout_p, tm), lambda bi, ji: (bi, 0, ji)),
            pl.BlockSpec((cout_last, 1), lambda bi, ji: (0, 0)),
            pl.BlockSpec((cout_last, 1), lambda bi, ji: (0, 0)),
        ],
        out_specs=pl.BlockSpec((None, cout_last, tm), lambda bi, ji: (bi, 0, ji)),
        out_shape=jax.ShapeDtypeStruct((b, cout_last, n_pad), jnp.float32),
        compiler_params=pltpu.CompilerParams(
            dimension_semantics=("parallel", "parallel"),
            vmem_limit_bytes=VMEM_LIMIT_BYTES),
    )(y_raw, scale[:cout_last], shift[:cout_last])


def _fold_bn(stats, gamma, beta, cout, cout_p, m_valid):
    """(sum, sumsq, gamma, beta) -> single per-channel (scale, shift)."""
    total = jnp.sum(stats, axis=(0, 1))                   # [cout_p, 2]
    mean = total[:, 0] / m_valid
    # TODO(synk): for very large B*N consider a Welford/shifted combine; the
    # E[y^2]-mean^2 form can lose precision when activations are large.
    var = jnp.maximum(total[:, 1] / m_valid - mean * mean, 0.0)
    gamma_p = jnp.pad(gamma.astype(jnp.float32), (0, cout_p - cout),
                      constant_values=1.0)
    beta_p = jnp.pad(beta.astype(jnp.float32), (0, cout_p - cout))
    scale = gamma_p * jax.lax.rsqrt(var + BN_EPS)
    shift = beta_p - mean * scale
    return scale.reshape(cout_p, 1), shift.reshape(cout_p, 1)


def init_flow_predictor_params(key, in_channel, mlp):
    """Synthetic params mimicking the PyTorch __init__ (xavier conv, BN 1/0)."""
    spec = [in_channel] + list(mlp)
    params = []
    for cin, cout in zip(spec[:-1], spec[1:]):
        key, sub = jax.random.split(key)
        bound = (6.0 / (cin + cout)) ** 0.5
        w = jax.random.uniform(sub, (cout, cin), jnp.float32, -bound, bound)
        params.append((w, jnp.ones((cout,), jnp.float32),
                       jnp.zeros((cout,), jnp.float32)))
    return params


def flow_predictor_forward(params, points_f1, cost_volume, upsampled_feat=None,
                           *, tile_n=1024):
    """JAX/Pallas equivalent of FlowPredictor.forward.

    points_f1:      [B, C1, N] or None
    cost_volume:    [B, C2, N]
    upsampled_feat: [B, C', N] or None
    returns:        [B, mlp[-1], N]   (float32)

    Note: on v7x you may pass tile_n=2048 (HBM is faster, VMEM still ample).
    """
    # Same branch logic as the PyTorch module; the concat happens in-kernel.
    if points_f1 is None:
        xs = [cost_volume]
    elif upsampled_feat is not None:
        xs = [points_f1, cost_volume, upsampled_feat]
    else:
        xs = [points_f1, cost_volume]

    b, _, n = xs[0].shape
    n_pad = _round_up(n, LANE)
    tm = _pick_tile(n_pad, tile_n)
    nt = n_pad // tm
    nsplit = 2 if (nt >= 2 and nt % 2 == 0) else 1   # second parallel axis (v7x)

    # Inputs are consumed in their native dtype (no wrapper-side cast); padded
    # lanes (zeros) are masked out of BatchNorm statistics downstream.
    if n_pad != n:
        xs = [jnp.pad(x, ((0, 0), (0, 0), (0, n_pad - n))) for x in xs]

    m_valid = float(b * n)
    c_splits = [x.shape[1] for x in xs]
    assert sum(c_splits) == params[0][0].shape[1], "in_channel mismatch"

    y_raw = scale = shift = None
    prev_cout_p = None
    for li, (w, gamma, beta) in enumerate(params):
        cout, cin = w.shape
        cout_p = _round_up(cout, CH_ALIGN)
        if li == 0:
            ws, off = [], 0
            for c in c_splits:                       # in-kernel channel concat
                wi = jnp.pad(w[:, off:off + c], ((0, cout_p - cout), (0, 0)))
                ws.append(wi.astype(jnp.bfloat16))
                off += c
            y_raw, stats = _layer_call(xs, ws, None, None, cout_p, n, tm,
                                       nsplit, True)
        else:
            w_p = jnp.pad(w, ((0, cout_p - cout), (0, prev_cout_p - cin)))
            y_raw, stats = _layer_call([y_raw], [w_p.astype(jnp.bfloat16)],
                                       scale, shift, cout_p, n, tm,
                                       nsplit, False)
        scale, shift = _fold_bn(stats, gamma, beta, cout, cout_p, m_valid)
        prev_cout_p = cout_p

    cout_last = params[-1][0].shape[0]
    out = _finalize_call(y_raw, scale, shift, tm, cout_last)   # pre-sliced rows
    return out if n_pad == n else out[:, :, :n]


def _reference_forward(params, points_f1, cost_volume, upsampled_feat=None):
    """Pure-JAX f32 reference (conv1x1 -> train-mode BN -> ReLU per layer)."""
    if points_f1 is None:
        x = cost_volume
    elif upsampled_feat is not None:
        x = jnp.concatenate((points_f1, cost_volume, upsampled_feat), axis=1)
    else:
        x = jnp.concatenate((points_f1, cost_volume), axis=1)
    x = x.astype(jnp.float32)
    for (w, gamma, beta) in params:
        y = jnp.einsum("oc,bcn->bon", w, x)
        mean = jnp.mean(y, axis=(0, 2), keepdims=True)
        var = jnp.mean((y - mean) ** 2, axis=(0, 2), keepdims=True)
        y = (y - mean) * jax.lax.rsqrt(var + BN_EPS)
        y = y * gamma.reshape(1, -1, 1) + beta.reshape(1, -1, 1)
        x = jnp.maximum(y, 0.0)
    return x


if __name__ == "__main__":
    key = jax.random.PRNGKey(0)

    # --- Test 1: tiny N (padded, masked-stats path), 2 input streams, f32 in.
    B, C1, C2, N = 2, 4, 4, 16
    mlp = [32, 16]
    k_p, k_c, k_w, key = jax.random.split(key, 4)
    points_f1 = jax.random.normal(k_p, (B, C1, N), jnp.float32)
    cost_volume = jax.random.normal(k_c, (B, C2, N), jnp.float32)
    params = init_flow_predictor_params(k_w, C1 + C2, mlp)

    out = jax.block_until_ready(
        flow_predictor_forward(params, points_f1, cost_volume, None))
    assert out.shape == (B, mlp[-1], N), out.shape
    ref = _reference_forward(params, points_f1, cost_volume, None)
    err1 = float(jnp.max(jnp.abs(out - ref)))
    assert err1 < 0.2, f"test1 max abs err vs reference: {err1}"

    # --- Test 2: 3 input streams (native bf16 inputs), N multiple of 128,
    #             exercises the N-split parallel axis and multi-tile reduction.
    B2, C1b, C2b, C3b, N2 = 2, 4, 4, 8, 512
    mlp2 = [32, 16]
    k_p2, k_c2, k_u2, k_w2, key = jax.random.split(key, 5)
    pf = jax.random.normal(k_p2, (B2, C1b, N2), jnp.float32).astype(jnp.bfloat16)
    cv = jax.random.normal(k_c2, (B2, C2b, N2), jnp.float32).astype(jnp.bfloat16)
    uf = jax.random.normal(k_u2, (B2, C3b, N2), jnp.float32).astype(jnp.bfloat16)
    params2 = init_flow_predictor_params(k_w2, C1b + C2b + C3b, mlp2)

    out2 = jax.block_until_ready(
        flow_predictor_forward(params2, pf, cv, uf, tile_n=128))
    assert out2.shape == (B2, mlp2[-1], N2), out2.shape
    ref2 = _reference_forward(params2, pf, cv, uf)
    err2 = float(jnp.max(jnp.abs(out2 - ref2)))
    assert err2 < 0.2, f"test2 max abs err vs reference: {err2}"

    print("KERNEL_OK")
</pallas_src>

<mosaic_0001>
module attributes {stable_mosaic.version = 11 : i64} {
  func.func @kernel(%arg0: i32, %arg1: i32, %arg2: i32, %arg3: memref<1x4x128xf32, #tpu.memory_space<vmem>>, %arg4: memref<1x4x128xf32, #tpu.memory_space<vmem>>, %arg5: memref<32x4xbf16, #tpu.memory_space<vmem>>, %arg6: memref<32x4xbf16, #tpu.memory_space<vmem>>, %arg7: memref<1x32x128xbf16, #tpu.memory_space<vmem>>, %arg8: memref<1x1x32x2xf32, #tpu.memory_space<vmem>>, %arg9: memref<32x128xf32, #tpu.memory_space<vmem>>, %arg10: memref<32x128xf32, #tpu.memory_space<vmem>>) attributes {dimension_semantics = [#tpu.dimension_semantics<parallel>, #tpu.dimension_semantics<parallel>, #tpu.dimension_semantics<arbitrary>], iteration_bounds = array<i64: 1, 2, 1>, scalar_prefetch = 0 : i64, scratch_operands = 2 : i64, tpu.core_type = #tpu.core_type<tc>, window_params = [{transform_indices = @transform_0, window_bounds = array<i64: 1, 4, 128>}, {transform_indices = @transform_1, window_bounds = array<i64: 1, 4, 128>}, {pipeline_mode = #tpu.pipeline_mode<synchronous>, transform_indices = @transform_2, window_bounds = array<i64: 32, 4>}, {pipeline_mode = #tpu.pipeline_mode<synchronous>, transform_indices = @transform_3, window_bounds = array<i64: 32, 4>}, {transform_indices = @transform_4, window_bounds = array<i64: 1, 32, 128>}, {transform_indices = @transform_5, window_bounds = array<i64: 1, 1, 32, 2>}]} {
    %c0_i32 = arith.constant 0 : i32
    %0 = arith.cmpi eq, %arg2, %c0_i32 : i32
    %1 = arith.extui %0 : i1 to i32
    %c0_i32_0 = arith.constant 0 : i32
    %2 = arith.cmpi ne, %1, %c0_i32_0 : i32
    scf.if %2 {
      %cst_24 = arith.constant 0.000000e+00 : f32
      %28 = vector.broadcast %cst_24 : f32 to vector<32x128xf32>
      %c0_25 = arith.constant 0 : index
      %c0_26 = arith.constant 0 : index
      %29 = vector.load %arg9[%c0_25, %c0_26] : memref<32x128xf32, #tpu.memory_space<vmem>>, vector<32x128xf32>
      tpu.vector_store %arg9[%c0_25, %c0_26], %28 {strides = array<i32>} : memref<32x128xf32, #tpu.memory_space<vmem>>, vector<32x128xf32>,
      %cst_27 = arith.constant 0.000000e+00 : f32
      %30 = vector.broadcast %cst_27 : f32 to vector<32x128xf32>
      %c0_28 = arith.constant 0 : index
      %c0_29 = arith.constant 0 : index
      %31 = vector.load %arg10[%c0_28, %c0_29] : memref<32x128xf32, #tpu.memory_space<vmem>>, vector<32x128xf32>
      tpu.vector_store %arg10[%c0_28, %c0_29], %30 {strides = array<i32>} : memref<32x128xf32, #tpu.memory_space<vmem>>, vector<32x128xf32>,
    } else {
    }
    %c0 = arith.constant 0 : index
    %c0_1 = arith.constant 0 : index
    %c0_2 = arith.constant 0 : index
    %3 = vector.load %arg3[%c0, %c0_1, %c0_2] : memref<1x4x128xf32, #tpu.memory_space<vmem>>, vector<1x4x128xf32>
    %4 = vector.shape_cast %3 : vector<1x4x128xf32> to vector<4x128xf32>
    %5 = arith.truncf %4 : vector<4x128xf32> to vector<4x128xbf16>
    %c0_3 = arith.constant 0 : index
    %c0_4 = arith.constant 0 : index
    %6 = vector.load %arg5[%c0_3, %c0_4] : memref<32x4xbf16, #tpu.memory_space<vmem>>, vector<32x4xbf16>
    %cst = arith.constant dense<0.000000e+00> : vector<32x128xf32>
    %7 = tpu.matmul %6, %5, %cst {dimension_numbers = #tpu.dot_dimension_numbers<[1], [0], [0], [1], [0, 0, 1, 1], [], []>} : vector<32x4xbf16>, vector<4x128xbf16>, vector<32x128xf32> -> vector<32x128xf32>
    %c0_5 = arith.constant 0 : index
    %c0_6 = arith.constant 0 : index
    %c0_7 = arith.constant 0 : index
    %8 = vector.load %arg4[%c0_5, %c0_6, %c0_7] : memref<1x4x128xf32, #tpu.memory_space<vmem>>, vector<1x4x128xf32>
    %9 = vector.shape_cast %8 : vector<1x4x128xf32> to vector<4x128xf32>
    %10 = arith.truncf %9 : vector<4x128xf32> to vector<4x128xbf16>
    %c0_8 = arith.constant 0 : index
    %c0_9 = arith.constant 0 : index
    %11 = vector.load %arg6[%c0_8, %c0_9] : memref<32x4xbf16, #tpu.memory_space<vmem>>, vector<32x4xbf16>
    %cst_10 = arith.constant dense<0.000000e+00> : vector<32x128xf32>
    %12 = tpu.matmul %11, %10, %cst_10 {dimension_numbers = #tpu.dot_dimension_numbers<[1], [0], [0], [1], [0, 0, 1, 1], [], []>} : vector<32x4xbf16>, vector<4x128xbf16>, vector<32x128xf32> -> vector<32x128xf32>
    %13 = arith.addf %7, %12 : vector<32x128xf32>
    %14 = arith.truncf %13 : vector<32x128xf32> to vector<32x128xbf16>
    %c0_11 = arith.constant 0 : index
    %c0_12 = arith.constant 0 : index
    %c0_13 = arith.constant 0 : index
    %15 = vector.load %arg7[%c0_11, %c0_12, %c0_13] : memref<1x32x128xbf16, #tpu.memory_space<vmem>>, vector<1x32x128xbf16>
    %16 = vector.shape_cast %15 : vector<1x32x128xbf16> to vector<32x128xbf16>
    %17 = vector.shape_cast %14 : vector<32x128xbf16> to vector<1x32x128xbf16>
    tpu.vector_store %arg7[%c0_11, %c0_12, %c0_13], %17 {strides = array<i32>} : memref<1x32x128xbf16, #tpu.memory_space<vmem>>, vector<1x32x128xbf16>,
    %18 = arith.mulf %13, %13 : vector<32x128xf32>
    %c0_14 = arith.constant 0 : index
    %c0_15 = arith.constant 0 : index
    %19 = vector.load %arg9[%c0_14, %c0_15] : memref<32x128xf32, #tpu.memory_space<vmem>>, vector<32x128xf32>
    %20 = arith.addf %19, %13 : vector<32x128xf32>
    %c0_16 = arith.constant 0 : index
    %c0_17 = arith.constant 0 : index
    %21 = vector.load %arg9[%c0_16, %c0_17] : memref<32x128xf32, #tpu.memory_space<vmem>>, vector<32x128xf32>
    tpu.vector_store %arg9[%c0_16, %c0_17], %20 {strides = array<i32>} : memref<32x128xf32, #tpu.memory_space<vmem>>, vector<32x128xf32>,
    %c0_18 = arith.constant 0 : index
    %c0_19 = arith.constant 0 : index
    %22 = vector.load %arg10[%c0_18, %c0_19] : memref<32x128xf32, #tpu.memory_space<vmem>>, vector<32x128xf32>
    %23 = arith.addf %22, %18 : vector<32x128xf32>
    %c0_20 = arith.constant 0 : index
    %c0_21 = arith.constant 0 : index
    %24 = vector.load %arg10[%c0_20, %c0_21] : memref<32x128xf32, #tpu.memory_space<vmem>>, vector<32x128xf32>
    tpu.vector_store %arg10[%c0_20, %c0_21], %23 {strides = array<i32>} : memref<32x128xf32, #tpu.memory_space<vmem>>, vector<32x128xf32>,
    %c0_i32_22 = arith.constant 0 : i32
    %25 = arith.cmpi eq, %arg2, %c0_i32_22 : i32
    %26 = arith.extui %25 : i1 to i32
    %c0_i32_23 = arith.constant 0 : i32
    %27 = arith.cmpi ne, %26, %c0_i32_23 : i32
    scf.if %27 {
      %c0_24 = arith.constant 0 : index
      %c0_25 = arith.constant 0 : index
      %28 = vector.load %arg9[%c0_24, %c0_25] : memref<32x128xf32, #tpu.memory_space<vmem>>, vector<32x128xf32>
      %cst_26 = arith.constant dense<0.000000e+00> : vector<32xf32>
      %29 = vector.multi_reduction <add>, %28, %cst_26 [1] : vector<32x128xf32> to vector<32xf32>
      %30 = vector.shape_cast %29 : vector<32xf32> to vector<32x1xf32>
      %c0_27 = arith.constant 0 : index
      %c0_28 = arith.constant 0 : index
      %c0_29 = arith.constant 0 : index
      %c0_30 = arith.constant 0 : index
      %31 = vector.load %arg8[%c0_27, %c0_28, %c0_29, %c0_30] : memref<1x1x32x2xf32, #tpu.memory_space<vmem>>, vector<1x1x32x1xf32>
      %32 = vector.shape_cast %31 : vector<1x1x32x1xf32> to vector<32x1xf32>
      %33 = vector.shape_cast %30 : vector<32x1xf32> to vector<1x1x32x1xf32>
      tpu.vector_store %arg8[%c0_27, %c0_28, %c0_29, %c0_30], %33 {strides = array<i32>} : memref<1x1x32x2xf32, #tpu.memory_space<vmem>>, vector<1x1x32x1xf32>,
      %c0_31 = arith.constant 0 : index
      %c0_32 = arith.constant 0 : index
      %34 = vector.load %arg10[%c0_31, %c0_32] : memref<32x128xf32, #tpu.memory_space<vmem>>, vector<32x128xf32>
      %cst_33 = arith.constant dense<0.000000e+00> : vector<32xf32>
      %35 = vector.multi_reduction <add>, %34, %cst_33 [1] : vector<32x128xf32> to vector<32xf32>
      %36 = vector.shape_cast %35 : vector<32xf32> to vector<32x1xf32>
      %c0_34 = arith.constant 0 : index
      %c0_35 = arith.constant 0 : index
      %c0_36 = arith.constant 0 : index
      %c1 = arith.constant 1 : index
      %37 = vector.load %arg8[%c0_34, %c0_35, %c0_36, %c1] : memref<1x1x32x2xf32, #tpu.memory_space<vmem>>, vector<1x1x32x1xf32>
      %38 = vector.shape_cast %37 : vector<1x1x32x1xf32> to vector<32x1xf32>
      %39 = vector.shape_cast %36 : vector<32x1xf32> to vector<1x1x32x1xf32>
      tpu.vector_store %arg8[%c0_34, %c0_35, %c0_36, %c1], %39 {strides = array<i32>} : memref<1x1x32x2xf32, #tpu.memory_space<vmem>>, vector<1x1x32x1xf32>,
    } else {
    }
    return
  }
  func.func @transform_0(%arg0: i32, %arg1: i32, %arg2: i32) -> (i32, i32, i32) {
    %c1_i32 = arith.constant 1 : i32
    %0 = arith.muli %arg0, %c1_i32 : i32
    %1 = arith.addi %0, %arg2 : i32
    %c0_i32 = arith.constant 0 : i32
    %c0_i32_0 = arith.constant 0 : i32
    return %arg1, %c0_i32, %1 : i32, i32, i32
  }
  func.func @transform_1(%arg0: i32, %arg1: i32, %arg2: i32) -> (i32, i32, i32) {
    %c1_i32 = arith.constant 1 : i32
    %0 = arith.muli %arg0, %c1_i32 : i32
    %1 = arith.addi %0, %arg2 : i32
    %c0_i32 = arith.constant 0 : i32
    %c0_i32_0 = arith.constant 0 : i32
    return %arg1, %c0_i32, %1 : i32, i32, i32
  }
  func.func @transform_2(%arg0: i32, %arg1: i32, %arg2: i32) -> (i32, i32) {
    %c0_i32 = arith.constant 0 : i32
    %c0_i32_0 = arith.constant 0 : i32
    %c0_i32_1 = arith.constant 0 : i32
    return %c0_i32, %c0_i32_0 : i32, i32
  }
  func.func @transform_3(%arg0: i32, %arg1: i32, %arg2: i32) -> (i32, i32) {
    %c0_i32 = arith.constant 0 : i32
    %c0_i32_0 = arith.constant 0 : i32
    %c0_i32_1 = arith.constant 0 : i32
    return %c0_i32, %c0_i32_0 : i32, i32
  }
  func.func @transform_4(%arg0: i32, %arg1: i32, %arg2: i32) -> (i32, i32, i32) {
    %c1_i32 = arith.constant 1 : i32
    %0 = arith.muli %arg0, %c1_i32 : i32
    %1 = arith.addi %0, %arg2 : i32
    %c0_i32 = arith.constant 0 : i32
    %c0_i32_0 = arith.constant 0 : i32
    return %arg1, %c0_i32, %1 : i32, i32, i32
  }
  func.func @transform_5(%arg0: i32, %arg1: i32, %arg2: i32) -> (i32, i32, i32, i32) {
    %c0_i32 = arith.constant 0 : i32
    %c0_i32_0 = arith.constant 0 : i32
    %c0_i32_1 = arith.constant 0 : i32
    return %arg0, %arg1, %c0_i32, %c0_i32_0 : i32, i32, i32, i32
  }
}

</mosaic_0001>

<llo_original>
// kernel: tpu_custom_call.1
$region0: #{tpu_custom_call.1}
  #allocation0 [shape = 'u32[]', space=smem, size = 0x4, offset = 0x4, fixed_abs, tag = 'smem constant byte address 0x4 - core index']
  #allocation1 [shape = 'u32[144,128]{1,0:T(1,128)}', space=vmem, size = 0x12000, scoped, tag = 'internal scratch']
  #allocation2 [shape = 'f32[32,128]{1,0:T(8,128)}', space=vmem, size = 0x4000, scoped, tag = 'scratch operand']
  #allocation3 [shape = 'f32[32,128]{1,0:T(8,128)}', space=vmem, size = 0x4000, scoped, tag = 'scratch operand']
  %s0 = inlined_call_operand.vmem [shape: f32[2,4,128], index: 0, kind: input, shape index: {}]
  %s1 = inlined_call_operand.vmem [shape: f32[2,4,128], index: 1, kind: input, shape index: {}]
  %s2 = inlined_call_operand.vmem [shape: bf16[32,4], index: 2, kind: input, shape index: {}]
  %s3 = inlined_call_operand.vmem [shape: bf16[32,4], index: 3, kind: input, shape index: {}]
  %s4 = inlined_call_operand.hbm [shape: bf16[2,32,128], index: 4, kind: output, shape index: {0}]
  %s5 = inlined_call_operand.vmem [shape: f32[1,2,32,2], index: 5, kind: output, shape index: {1}]
  %6 = xla_tuple %s4, %s5
  %s7 = sld [smem:[#allocation0]]
  $region65: #{tpu_custom_call.1} parent=0
    _
  %s9 = ssub.s32 1, %s7
  %s10 = scalar_select 0, %s9, %s7
  $region1: #{tpu_custom_call.1} parent=0
    #allocation4 [shape = 'u8[16384]{0}', space=vmem, size = 0x4000, scoped, tag = 'output window, operand 0']
    #allocation5 [shape = 's32[2]{0}', space=sflag, size = 0x8, scoped, tag = 'scoped memory for tpu_custom_call.1']
    %11 = vsyncpa [#allocation5], 0
    %s12 = scalar_lea.sflag [#allocation5], 1
    %13 = vsyncpa %s12, 0
    loop: start=0, step=1, limit=4
    $region2: #{tpu_custom_call.1} parent=1 // loop_pre_header
      _
    $region3: #{tpu_custom_call.1} parent=1 // loop_header
      %s15 = sphi 0, %s19
      %p16 = scmp.ge.s32.totalorder %s15, 4
      %s22 = sphi 0, %s41
      %s23 = sphi 0, %s37
      %s24 = sphi 0, %s33
      %s25 = sphi 0, %s22
      %s26 = sphi 0, %s23
      %s27 = sphi 0, %s24
      %s28 = sphi 0, %s25
      %s29 = sphi 0, %s26
      %s30 = sphi 0, %s27
      %s48 = sphi 0, %s50
      %s51 = sphi 0, %s48
      %s52 = sphi 0, %s51
      %s68 = sphi 0, %s52
      %s78 = sphi 0, %s80
      %s81 = sphi 0, %s78
      %s82 = sphi 0, %s81
      %s98 = sphi 0, %s82
      %s102 = sphi 0, %s102
      %s104 = sphi 0, %s102
      %s105 = sphi 0, %s104
      %s119 = sphi 0, %s105
      %s123 = sphi 0, %s123
      %s125 = sphi 0, %s123
      %s126 = sphi 0, %s125
      %s140 = sphi 0, %s126
      %s150 = sphi 0, %s152
      %s153 = sphi 0, %s150
      %s154 = sphi 0, %s153
      %s170 = sphi 0, %s154
      %s178 = sphi 0, %s180
      %s181 = sphi 0, %s178
      %s182 = sphi 0, %s181
      %s198 = sphi 0, %s182
    $region4: #{tpu_custom_call.1} parent=1 // loop_header_branch
      %18 = sbr.rel (%p16) target = $region8
    $region5: #{tpu_custom_call.1} parent=1 // loop_body
      %s20 = ssub.s32 %s15, 1
      %s21 = ssub.s32 %s15, 2
      %s31 = sadd.s32 1, %s24
      %p32 = scmp.ge.s32.totalorder %s31, 1
      %s33 = scalar_select %p32, 0, %s31
      %s34 = sadd.s32 1, %s23
      %s35 = scalar_select %p32, %s34, %s23
      %p36 = scmp.ge.s32.totalorder %s35, 2
      %s37 = scalar_select %p36, 0, %s35
      %s38 = sadd.s32 1, %s22
      %s39 = scalar_select %p36, %s38, %s22
      %p40 = scmp.ge.s32.totalorder %s39, 1
      %s41 = scalar_select %p40, 0, %s39
      %s42 = sadd.s32 %s22, %s24
      %s43 = sadd.s32 %s41, %s33
      %s44 = ssub.s32 %s23, %s37
      %s45 = ssub.s32 %s42, %s43
      %s46 = sor.u32 %s44, %s45
      %p47 = scmp.eq.s32.totalorder %s46, 0
      %s49 = sadd.s32 %s48, 1
      %s50 = scalar_select %p47, %s48, %s49
      %p53 = pneg %p47
      %p54 = scmp.eq.s32.totalorder %s15, 1
      %p55 = por %p53, %p54
      %p56 = scmp.ne.s32.totalorder %s48, %s51
      %p57 = scmp.eq.s32.totalorder %s15, 0
      %p58 = por %p56, %p57
      %p59 = scmp.ne.s32.totalorder %s48, %s51
      %p60 = scmp.eq.s32.totalorder %s20, 1
      %p61 = por %p59, %p60
      %p62 = scmp.ne.s32.totalorder %s51, %s52
      %p63 = scmp.eq.s32.totalorder %s20, 0
      %p64 = por %p62, %p63
      %p65 = scmp.ne.s32.totalorder %s51, %s52
      %p66 = scmp.eq.s32.totalorder %s21, 1
      %p67 = por %p65, %p66
      %p69 = scmp.ne.s32.totalorder %s52, %s68
      %p70 = scmp.eq.s32.totalorder %s21, 0
      %p71 = por %p69, %p70
      %s72 = sadd.s32 %s22, %s24
      %s73 = sadd.s32 %s41, %s33
      %s74 = ssub.s32 %s23, %s37
      %s75 = ssub.s32 %s72, %s73
      %s76 = sor.u32 %s74, %s75
      %p77 = scmp.eq.s32.totalorder %s76, 0
      %s79 = sadd.s32 %s78, 1
      %s80 = scalar_select %p77, %s78, %s79
      %p83 = pneg %p77
      %p84 = scmp.eq.s32.totalorder %s15, 1
      %p85 = por %p83, %p84
      %p86 = scmp.ne.s32.totalorder %s78, %s81
      %p87 = scmp.eq.s32.totalorder %s15, 0
      %p88 = por %p86, %p87
      %p89 = scmp.ne.s32.totalorder %s78, %s81
      %p90 = scmp.eq.s32.totalorder %s20, 1
      %p91 = por %p89, %p90
      %p92 = scmp.ne.s32.totalorder %s81, %s82
      %p93 = scmp.eq.s32.totalorder %s20, 0
      %p94 = por %p92, %p93
      %p95 = scmp.ne.s32.totalorder %s81, %s82
      %p96 = scmp.eq.s32.totalorder %s21, 1
      %p97 = por %p95, %p96
      %p99 = scmp.ne.s32.totalorder %s82, %s98
      %p100 = scmp.eq.s32.totalorder %s21, 0
      %p101 = por %p99, %p100
      %s103 = sadd.s32 %s102, 1
      %p106 = scmp.eq.s32.totalorder %s15, 1
      %p107 = scmp.ne.s32.totalorder %s102, %s104
      %p108 = scmp.eq.s32.totalorder %s15, 0
      %p109 = por %p107, %p108
      %p110 = scmp.ne.s32.totalorder %s102, %s104
      %p111 = scmp.eq.s32.totalorder %s20, 1
      %p112 = por %p110, %p111
      %p113 = scmp.ne.s32.totalorder %s104, %s105
      %p114 = scmp.eq.s32.totalorder %s20, 0
      %p115 = por %p113, %p114
      %p116 = scmp.ne.s32.totalorder %s104, %s105
      %p117 = scmp.eq.s32.totalorder %s21, 1
      %p118 = por %p116, %p117
      %p120 = scmp.ne.s32.totalorder %s105, %s119
      %p121 = scmp.eq.s32.totalorder %s21, 0
      %p122 = por %p120, %p121
      %s124 = sadd.s32 %s123, 1
      %p127 = scmp.eq.s32.totalorder %s15, 1
      %p128 = scmp.ne.s32.totalorder %s123, %s125
      %p129 = scmp.eq.s32.totalorder %s15, 0
      %p130 = por %p128, %p129
      %p131 = scmp.ne.s32.totalorder %s123, %s125
      %p132 = scmp.eq.s32.totalorder %s20, 1
      %p133 = por %p131, %p132
      %p134 = scmp.ne.s32.totalorder %s125, %s126
      %p135 = scmp.eq.s32.totalorder %s20, 0
      %p136 = por %p134, %p135
      %p137 = scmp.ne.s32.totalorder %s125, %s126
      %p138 = scmp.eq.s32.totalorder %s21, 1
      %p139 = por %p137, %p138
      %p141 = scmp.ne.s32.totalorder %s126, %s140
      %p142 = scmp.eq.s32.totalorder %s21, 0
      %p143 = por %p141, %p142
      %s144 = sadd.s32 %s22, %s24
      %s145 = sadd.s32 %s41, %s33
      %s146 = ssub.s32 %s23, %s37
      %s147 = ssub.s32 %s144, %s145
      %s148 = sor.u32 %s146, %s147
      %p149 = scmp.eq.s32.totalorder %s148, 0
      %s151 = sadd.s32 %s150, 1
      %s152 = scalar_select %p149, %s150, %s151
      %p155 = pneg %p149
      %p156 = scmp.eq.s32.totalorder %s15, 1
      %p157 = por %p155, %p156
      %p158 = scmp.ne.s32.totalorder %s150, %s153
      %p159 = scmp.eq.s32.totalorder %s15, 0
      %p160 = por %p158, %p159
      %p161 = scmp.ne.s32.totalorder %s150, %s153
      %p162 = scmp.eq.s32.totalorder %s20, 1
      %p163 = por %p161, %p162
      %p164 = scmp.ne.s32.totalorder %s153, %s154
      %p165 = scmp.eq.s32.totalorder %s20, 0
      %p166 = por %p164, %p165
      %p167 = scmp.ne.s32.totalorder %s153, %s154
      %p168 = scmp.eq.s32.totalorder %s21, 1
      %p169 = por %p167, %p168
      %p171 = scmp.ne.s32.totalorder %s154, %s170
      %p172 = scmp.eq.s32.totalorder %s21, 0
      %p173 = por %p171, %p172
      %s174 = ssub.s32 %s22, %s41
      %s175 = ssub.s32 %s23, %s37
      %s176 = sor.u32 %s174, %s175
      %p177 = scmp.eq.s32.totalorder %s176, 0
      %s179 = sadd.s32 %s178, 1
      %s180 = scalar_select %p177, %s178, %s179
      %p183 = pneg %p177
      %p184 = scmp.eq.s32.totalorder %s15, 1
      %p185 = por %p183, %p184
      %p186 = scmp.ne.s32.totalorder %s178, %s181
      %p187 = scmp.eq.s32.totalorder %s15, 0
      %p188 = por %p186, %p187
      %p189 = scmp.ne.s32.totalorder %s178, %s181
      %p190 = scmp.eq.s32.totalorder %s20, 1
      %p191 = por %p189, %p190
      %p192 = scmp.ne.s32.totalorder %s181, %s182
      %p193 = scmp.eq.s32.totalorder %s20, 0
      %p194 = por %p192, %p193
      %p195 = scmp.ne.s32.totalorder %s181, %s182
      %p196 = scmp.eq.s32.totalorder %s21, 1
      %p197 = por %p195, %p196
      %p199 = scmp.ne.s32.totalorder %s182, %s198
      %p200 = scmp.eq.s32.totalorder %s21, 0
      %p201 = por %p199, %p200
      %p202 = scmp.le.s32.totalorder 1, %s15
      %p203 = scmp.lt.s32.totalorder %s15, 3
      %p204 = pnand %p202, %p203
      %p205 = pneg %p204
      // Predicated region
      $region9: #{tpu_custom_call.1} parent=5 // pred_check
        _
      $region10: #{tpu_custom_call.1} parent=5 // pred_check_branch
        %207 = sbr.rel (%p204) target = $region12
      $region11: #{tpu_custom_call.1} parent=5 // pred_region
        %s208 = ssub.s32 %s15, 1
        // Predicated region
        $region13: #{tpu_custom_call.1} parent=11 // pred_check
          %p209 = pneg %p115
        $region14: #{tpu_custom_call.1} parent=11 // pred_check_branch
          %211 = sbr.rel (%p209) target = $region16
        $region15: #{tpu_custom_call.1} parent=11 // pred_region
          _
        $region16: #{tpu_custom_call.1} parent=11 // pred_fallthru
          _
        // Predicated region
        $region17: #{tpu_custom_call.1} parent=11 // pred_check
          %p212 = pneg %p136
        $region18: #{tpu_custom_call.1} parent=11 // pred_check_branch
          %214 = sbr.rel (%p212) target = $region20
        $region19: #{tpu_custom_call.1} parent=11 // pred_region
          _
        $region20: #{tpu_custom_call.1} parent=11 // pred_fallthru
          _
      $region12: #{tpu_custom_call.1} parent=5 // pred_fallthru
        _
      %p215 = scmp.lt.s32.totalorder %s15, 2
      // Predicated region
      $region21: #{tpu_custom_call.1} parent=5 // pred_check
        %p216 = pneg %p215
      $region22: #{tpu_custom_call.1} parent=5 // pred_check_branch
        %218 = sbr.rel (%p216) target = $region24
      $region23: #{tpu_custom_call.1} parent=5 // pred_region
        // Predicated region
        $region25: #{tpu_custom_call.1} parent=23 // pred_check
          %p219 = pneg %p58
        $region26: #{tpu_custom_call.1} parent=23 // pred_check_branch
          %221 = sbr.rel (%p219) target = $region28
        $region27: #{tpu_custom_call.1} parent=23 // pred_region
          %s222 = sadd.s32 %s22, %s24
          %p223 = scmp.lt.s32.totalorder %s23, 1
          %s224 = scalar_select %p223, %s23, 1
          %p225 = scmp.lt.s32.totalorder %s222, 0
          %s226 = scalar_select %p225, %s222, 0
          %s227 = sadd.s32 %s226, %s224
          %s228 = smul.addr %s227, 4
          %s229 = scalar_lea.vmem %s0, %s228
          %s230 = sadd.s32 %s22, %s24
        $region28: #{tpu_custom_call.1} parent=23 // pred_fallthru
          _
        // Predicated region
        $region29: #{tpu_custom_call.1} parent=23 // pred_check
          %p231 = pneg %p88
        $region30: #{tpu_custom_call.1} parent=23 // pred_check_branch
          %233 = sbr.rel (%p231) target = $region32
        $region31: #{tpu_custom_call.1} parent=23 // pred_region
          %s234 = sadd.s32 %s22, %s24
          %p235 = scmp.lt.s32.totalorder %s23, 1
          %s236 = scalar_select %p235, %s23, 1
          %p237 = scmp.lt.s32.totalorder %s234, 0
          %s238 = scalar_select %p237, %s234, 0
          %s239 = sadd.s32 %s238, %s236
          %s240 = smul.addr %s239, 4
          %s241 = scalar_lea.vmem %s1, %s240
          %s242 = sadd.s32 %s22, %s24
        $region32: #{tpu_custom_call.1} parent=23 // pred_fallthru
          _
      $region24: #{tpu_custom_call.1} parent=5 // pred_fallthru
        _
      %p243 = scmp.le.s32.totalorder 1, %s15
      %p244 = scmp.lt.s32.totalorder %s15, 3
      %p245 = pnand %p243, %p244
      %p246 = pneg %p245
      // Predicated region
      $region33: #{tpu_custom_call.1} parent=5 // pred_check
        _
      $region34: #{tpu_custom_call.1} parent=5 // pred_check_branch
        %248 = sbr.rel (%p245) target = $region36
      $region35: #{tpu_custom_call.1} parent=5 // pred_region
        %s249 = ssub.s32 %s15, 1
        %s250 = sadd.s32 %s25, %s27
        %p251 = scmp.lt.s32.totalorder %s26, 1
        %s252 = scalar_select %p251, %s26, 1
        %p253 = scmp.lt.s32.totalorder %s250, 0
        %s254 = scalar_select %p253, %s250, 0
        %s255 = sadd.s32 %s254, %s252
        %s256 = smul.addr %s255, 4
        %s257 = scalar_lea.vmem %s0, %s256
        %p258 = pneg %p64
        %p259 = pneg %p61
        %s260 = sadd.s32 %s25, %s27
        %p261 = scmp.lt.s32.totalorder %s26, 1
        %s262 = scalar_select %p261, %s26, 1
        %p263 = scmp.lt.s32.totalorder %s260, 0
        %s264 = scalar_select %p263, %s260, 0
        %s265 = sadd.s32 %s264, %s262
        %s266 = smul.addr %s265, 4
        %s267 = scalar_lea.vmem %s1, %s266
        %p268 = pneg %p94
        %p269 = pneg %p91
        %p270 = pneg %p115
        %p271 = pneg %p112
        %p272 = pneg %p136
        %p273 = pneg %p133
        %p274 = pneg %p166
        %p275 = pneg %p163
        %s276 = sand.u32 %s153, 1
        %s277 = scalar_lea.sflag [#allocation5], %s276
        %s278 = sand.u32 %s153, 1
        %s279 = smul.addr %s278, 16
        %s280 = scalar_lea.vmem [#allocation4], %s279
        %p281 = pneg %p194
        %p282 = pneg %p191
        %p283 = scmp.lt.s32.totalorder %s25, 0
        %s284 = scalar_select %p283, %s25, 0
        %p285 = scmp.lt.s32.totalorder %s26, 1
        %s286 = scalar_select %p285, %s26, 1
        %s287 = smul.addr %s286, 4
        %s288 = smul.addr %s284, 8
        %s289 = sadd.s32 %s287, %s288
        %s290 = smul.addr %s289, 8
        %s291 = scalar_lea.vmem %s5, %s290
        %s292 = sadd.s32 %s25, %s27
        %p293 = scmp.lt.s32.totalorder %s26, 1
        %s294 = scalar_select %p293, %s26, 1
        %p295 = scmp.lt.s32.totalorder %s292, 0
        %s296 = scalar_select %p295, %s292, 0
        %s297 = sadd.s32 %s296, %s294
        %s298 = smul.addr %s297, 4
        %s299 = scalar_lea.vmem %s0, %s298
        %s300 = sadd.s32 %s25, %s27
        %s301 = sadd.s32 %s25, %s27
        %p302 = scmp.lt.s32.totalorder %s26, 1
        %s303 = scalar_select %p302, %s26, 1
        %p304 = scmp.lt.s32.totalorder %s301, 0
        %s305 = scalar_select %p304, %s301, 0
        %s306 = sadd.s32 %s305, %s303
        %s307 = smul.addr %s306, 4
        %s308 = scalar_lea.vmem %s1, %s307
        %s309 = sadd.s32 %s25, %s27
        %s310 = sadd.s32 %s25, %s27
        %p311 = scmp.lt.s32.totalorder %s25, 0
        %s312 = scalar_select %p311, %s25, 0
        %p313 = scmp.lt.s32.totalorder %s26, 1
        %s314 = scalar_select %p313, %s26, 1
        %s315 = smul.addr %s314, 4
        %s316 = smul.addr %s312, 8
        %s317 = sadd.s32 %s315, %s316
        %s318 = smul.addr %s317, 8
        %s319 = scalar_lea.vmem %s5, %s318
        %p321 = scmp.eq.s32.totalorder %s27, 0
        // Predicated region
        $region37: #{tpu_custom_call.1} parent=35 // pred_check
          %p322 = pneg %p321
        $region38: #{tpu_custom_call.1} parent=35 // pred_check_branch
          %324 = sbr.rel (%p322) target = $region40
        $region39: #{tpu_custom_call.1} parent=35 // pred_region
          %325 = vst [vmem:[#allocation2] sm:$0xff] 0.0
          %326 = vst [vmem:[#allocation2 + $0x8] sm:$0xff] 0.0
          %327 = vst [vmem:[#allocation2 + $0x10] sm:$0xff] 0.0
          %328 = vst [vmem:[#allocation2 + $0x18] sm:$0xff] 0.0
          %329 = vst [vmem:[#allocation3] sm:$0xff] 0.0
          %330 = vst [vmem:[#allocation3 + $0x8] sm:$0xff] 0.0
          %331 = vst [vmem:[#allocation3 + $0x10] sm:$0xff] 0.0
          %332 = vst [vmem:[#allocation3 + $0x18] sm:$0xff] 0.0
        $region40: #{tpu_custom_call.1} parent=35 // pred_fallthru
          _
        %v333 = vld [vmem:[%s299] sm:$0xf]
        %v334 = vpack.c.bf16 %v333, %v333
        %v335 = vld [vmem:[%s2] sm:$0xf]
        %v336 = vld [vmem:[%s2 + $0x4] sm:$0xf]
        %v337 = vld [vmem:[%s2 + $0x8] sm:$0xf]
        %v338 = vld [vmem:[%s2 + $0xc] sm:$0xf]
        %v339 = vld [vmem:[%s308] sm:$0xf]
        %v340 = vpack.c.bf16 %v339, %v339
        %v341 = vld [vmem:[%s3] sm:$0xf]
        %v342 = vld [vmem:[%s3 + $0x4] sm:$0xf]
        %v343 = vld [vmem:[%s3 + $0x8] sm:$0xf]
        %v344 = vld [vmem:[%s3 + $0xc] sm:$0xf]
        %v349 = vunpack.c.l.b16 %v341
        %v350 = vunpack.c.l.b16 %v342
        %v351 = vunpack.c.l.b16 %v343
        %v352 = vunpack.c.l.b16 %v344
        %v353 = vpack.c.b16 %v350, %v349
        %v354 = vpack.c.b16 %v352, %v351
        %vm355 = vcmask 31744
        %v357 = vsel %vm355, %v353, 0
        %v360 = vsel %vm355, %v354, 0
        %vm362 = vcmask 1041408
        %v364 = vsel %vm362, %v340, 0
        %366 = vmatprep.subr.bf16.mxu0 0
        %367 = vmatpush1.bf16.msra.mxu0 %v364
        %368 = vmatprep.subr.bf16.mxu0 0
        %369 = vmatpush1.bf16.msra.mxu0 0
        %370 = vmatprep.subr.bf16.mxu0 0
        %371 = vmatpush1.bf16.msra.mxu0 0
        %372 = vmatprep.subr.bf16.mxu0 0
        %373 = vmatpush1.bf16.msra.mxu0 0
        %374 = vmatprep.subr.bf16.mxu0 0
        %375 = vmatpush1.bf16.msra.mxu0 0
        %376 = vmatprep.subr.bf16.mxu0 0
        %377 = vmatpush1.bf16.msra.mxu0 0
        %378 = vmatprep.subr.bf16.mxu0 0
        %379 = vmatpush1.bf16.msra.mxu0 0
        %380 = vmatprep.subr.bf16.mxu0 0
        %381 = vmatpush1.bf16.msra.mxu0 0
        %382 = vmatprep.subr.bf16.mxu0 0
        %383 = vmatpush1.bf16.msra.mxu0 0
        %384 = vmatprep.subr.bf16.mxu0 0
        %385 = vmatpush1.bf16.msra.mxu0 0
        %386 = vmatprep.subr.bf16.mxu0 0
        %387 = vmatpush1.bf16.msra.mxu0 0
        %388 = vmatprep.subr.bf16.mxu0 0
        %389 = vmatpush1.bf16.msra.mxu0 0
        %390 = vmatprep.subr.bf16.mxu0 0
        %391 = vmatpush1.bf16.msra.mxu0 0
        %392 = vmatprep.subr.bf16.mxu0 0
        %393 = vmatpush1.bf16.msra.mxu0 0
        %394 = vmatprep.subr.bf16.mxu0 0
        %395 = vmatpush1.bf16.msra.mxu0 0
        %396 = vmatprep.subr.bf16.mxu0 0
        %397 = vmatpush1.bf16.msra.mxu0 0
        %398 = vmatprep.mubr.bf16.mxu0 0
        %399 = vmatmul.mubr.bf16.gmra.mrb[0].mxu0 %v357
        %v400 = vpop.f32.mrb[0].mxu0
        %v401 = vadd.f32 0.0, %v400
        %v402 = vpop.f32.mrb[0].mxu0
        %v403 = vpop.f32.mrb[0].mxu0
        %v404 = vadd.f32 0.0, %v403
        %v405 = vpop.f32.mrb[0].mxu0
        %406 = vmatprep.mubr.bf16.mxu0 0
        %407 = vmatmul.mubr.bf16.gmra.mrb[0].mxu0 %v360
        %v408 = vpop.f32.mrb[0].mxu0
        %v409 = vadd.f32 0.0, %v408
        %v410 = vpop.f32.mrb[0].mxu0
        %v411 = vpop.f32.mrb[0].mxu0
        %v412 = vadd.f32 0.0, %v411
        %v413 = vpop.f32.mrb[0].mxu0
        %414 = vdwg.mxu0
        %v419 = vunpack.c.l.b16 %v335
        %v420 = vunpack.c.l.b16 %v336
        %v421 = vunpack.c.l.b16 %v337
        %v422 = vunpack.c.l.b16 %v338
        %v423 = vpack.c.b16 %v420, %v419
        %v424 = vpack.c.b16 %v422, %v421
        %v426 = vsel %vm355, %v423, 0
        %v429 = vsel %vm355, %v424, 0
        %v432 = vsel %vm362, %v334, 0
        %434 = vmatprep.subr.bf16.mxu0 0
        %435 = vmatpush1.bf16.msra.mxu0 %v432
        %436 = vmatprep.subr.bf16.mxu0 0
        %437 = vmatpush1.bf16.msra.mxu0 0
        %438 = vmatprep.subr.bf16.mxu0 0
        %439 = vmatpush1.bf16.msra.mxu0 0
        %440 = vmatprep.subr.bf16.mxu0 0
        %441 = vmatpush1.bf16.msra.mxu0 0
        %442 = vmatprep.subr.bf16.mxu0 0
        %443 = vmatpush1.bf16.msra.mxu0 0
        %444 = vmatprep.subr.bf16.mxu0 0
        %445 = vmatpush1.bf16.msra.mxu0 0
        %446 = vmatprep.subr.bf16.mxu0 0
        %447 = vmatpush1.bf16.msra.mxu0 0
        %448 = vmatprep.subr.bf16.mxu0 0
        %449 = vmatpush1.bf16.msra.mxu0 0
        %450 = vmatprep.subr.bf16.mxu0 0
        %451 = vmatpush1.bf16.msra.mxu0 0
        %452 = vmatprep.subr.bf16.mxu0 0
        %453 = vmatpush1.bf16.msra.mxu0 0
        %454 = vmatprep.subr.bf16.mxu0 0
        %455 = vmatpush1.bf16.msra.mxu0 0
        %456 = vmatprep.subr.bf16.mxu0 0
        %457 = vmatpush1.bf16.msra.mxu0 0
        %458 = vmatprep.subr.bf16.mxu0 0
        %459 = vmatpush1.bf16.msra.mxu0 0
        %460 = vmatprep.subr.bf16.mxu0 0
        %461 = vmatpush1.bf16.msra.mxu0 0
        %462 = vmatprep.subr.bf16.mxu0 0
        %463 = vmatpush1.bf16.msra.mxu0 0
        %464 = vmatprep.subr.bf16.mxu0 0
        %465 = vmatpush1.bf16.msra.mxu0 0
        %466 = vmatprep.mubr.bf16.mxu0 0
        %467 = vmatmul.mubr.bf16.gmra.mrb[0].mxu0 %v426
        %v468 = vpop.f32.mrb[0].mxu0
        %v469 = vadd.f32 %v401, %v468
        %v470 = vpop.f32.mrb[0].mxu0
        %v471 = vpop.f32.mrb[0].mxu0
        %v472 = vadd.f32 %v404, %v471
        %v473 = vpop.f32.mrb[0].mxu0
        %474 = vmatprep.mubr.bf16.mxu0 0
        %475 = vmatmul.mubr.bf16.gmra.mrb[0].mxu0 %v429
        %v476 = vpop.f32.mrb[0].mxu0
        %v477 = vadd.f32 %v409, %v476
        %v478 = vpop.f32.mrb[0].mxu0
        %v479 = vpop.f32.mrb[0].mxu0
        %v480 = vadd.f32 %v412, %v479
        %v481 = vpop.f32.mrb[0].mxu0
        %482 = vdwg.mxu0
        %v483 = vpack.c.bf16 %v472, %v469
        %v484 = vpack.c.bf16 %v480, %v477
        %v487 = vunpack.c.l.b16 %v483
        %v488 = vunpack.c.h.b16 %v483
        %v489 = vunpack.c.l.b16 %v484
        %v490 = vunpack.c.h.b16 %v484
        %v491 = vpack.c.b16 %v487, %v487
        %v492 = vpack.c.b16 %v488, %v488
        %v493 = vpack.c.b16 %v489, %v489
        %v494 = vpack.c.b16 %v490, %v490
        %499 = vst [vmem:[%s280] sm:$0xf] %v491
        %500 = vst [vmem:[%s280 + $0x4] sm:$0xf] %v492
        %501 = vst [vmem:[%s280 + $0x8] sm:$0xf] %v493
        %502 = vst [vmem:[%s280 + $0xc] sm:$0xf] %v494
        %v503 = vmul.f32 %v469, %v469
        %v504 = vmul.f32 %v472, %v472
        %v505 = vmul.f32 %v477, %v477
        %v506 = vmul.f32 %v480, %v480
        %v507 = vld [vmem:[#allocation2] sm:$0xff]
        %v508 = vld [vmem:[#allocation2 + $0x8] sm:$0xff]
        %v509 = vld [vmem:[#allocation2 + $0x10] sm:$0xff]
        %v510 = vld [vmem:[#allocation2 + $0x18] sm:$0xff]
        %v511 = vadd.f32 %v507, %v469
        %v512 = vadd.f32 %v508, %v472
        %v513 = vadd.f32 %v509, %v477
        %v514 = vadd.f32 %v510, %v480
        %515 = vst [vmem:[#allocation2] sm:$0xff] %v511
        %516 = vst [vmem:[#allocation2 + $0x8] sm:$0xff] %v512
        %517 = vst [vmem:[#allocation2 + $0x10] sm:$0xff] %v513
        %518 = vst [vmem:[#allocation2 + $0x18] sm:$0xff] %v514
        %v519 = vld [vmem:[#allocation3] sm:$0xff]
        %v520 = vld [vmem:[#allocation3 + $0x8] sm:$0xff]
        %v521 = vld [vmem:[#allocation3 + $0x10] sm:$0xff]
        %v522 = vld [vmem:[#allocation3 + $0x18] sm:$0xff]
        %v523 = vadd.f32 %v519, %v503
        %v524 = vadd.f32 %v520, %v504
        %v525 = vadd.f32 %v521, %v505
        %v526 = vadd.f32 %v522, %v506
        %527 = vst [vmem:[#allocation3] sm:$0xff] %v523
        %528 = vst [vmem:[#allocation3 + $0x8] sm:$0xff] %v524
        %529 = vst [vmem:[#allocation3 + $0x10] sm:$0xff] %v525
        %530 = vst [vmem:[#allocation3 + $0x18] sm:$0xff] %v526
        // Predicated region
        $region41: #{tpu_custom_call.1} parent=35 // pred_check
          %p531 = pneg %p321
        $region42: #{tpu_custom_call.1} parent=35 // pred_check_branch
          %533 = sbr.rel (%p531) target = $region44
        $region43: #{tpu_custom_call.1} parent=35 // pred_region
          %v534 = vld [vmem:[#allocation2] sm:$0xff]
          %v535 = vld [vmem:[#allocation2 + $0x8] sm:$0xff]
          %v536 = vld [vmem:[#allocation2 + $0x10] sm:$0xff]
          %v537 = vld [vmem:[#allocation2 + $0x18] sm:$0xff]
          %538 = vadd.xlane.f32.xlu0 %v534
          %v539 = vpop.xlane.xlu0 %538
          %540 = vadd.xlane.f32.xlu0 %v535
          %v541 = vpop.xlane.xlu0 %540
          %542 = vadd.xlane.f32.xlu0 %v536
          %v543 = vpop.xlane.xlu0 %542
          %544 = vadd.xlane.f32.xlu0 %v537
          %v545 = vpop.xlane.xlu0 %544
          %vm546 = vcmask 7168
          %547 = vst.msk [vmem:[%s319] sm:$0xff] %vm546, %v539
          %548 = vst.msk [vmem:[%s319 + $0x8] sm:$0xff] %vm546, %v541
          %549 = vst.msk [vmem:[%s319 + $0x10] sm:$0xff] %vm546, %v543
          %550 = vst.msk [vmem:[%s319 + $0x18] sm:$0xff] %vm546, %v545
          %v551 = vld [vmem:[#allocation3] sm:$0xff]
          %v552 = vld [vmem:[#allocation3 + $0x8] sm:$0xff]
          %v553 = vld [vmem:[#allocation3 + $0x10] sm:$0xff]
          %v554 = vld [vmem:[#allocation3 + $0x18] sm:$0xff]
          %555 = vadd.xlane.f32.xlu0 %v551
          %v556 = vpop.xlane.xlu0 %555
          %557 = vadd.xlane.f32.xlu0 %v552
          %v558 = vpop.xlane.xlu0 %557
          %559 = vadd.xlane.f32.xlu0 %v553
          %v560 = vpop.xlane.xlu0 %559
          %561 = vadd.xlane.f32.xlu0 %v554
          %v562 = vpop.xlane.xlu0 %561
          %vm563 = vcmask 15368
          %564 = vst.msk [vmem:[%s319] sm:$0xff] %vm563, %v556
          %565 = vst.msk [vmem:[%s319 + $0x8] sm:$0xff] %vm563, %v558
          %566 = vst.msk [vmem:[%s319 + $0x10] sm:$0xff] %vm563, %v560
          %567 = vst.msk [vmem:[%s319 + $0x18] sm:$0xff] %vm563, %v562
        $region44: #{tpu_custom_call.1} parent=35 // pred_fallthru
          _
        %s568 = sand.u32 %s153, 1
        %s569 = scalar_lea.sflag [#allocation5], %s568
        %s570 = sand.u32 %s153, 1
        %s571 = smul.addr %s570, 16
        %s572 = scalar_lea.vmem [#allocation4], %s571
        %p573 = scmp.lt.s32.totalorder %s25, 0
        %s574 = scalar_select %p573, %s25, 0
        %p575 = scmp.lt.s32.totalorder %s26, 1
        %s576 = scalar_select %p575, %s26, 1
        %s577 = smul.addr %s576, 4
        %s578 = smul.addr %s574, 8
        %s579 = sadd.s32 %s577, %s578
        %s580 = smul.addr %s579, 8
        %s581 = scalar_lea.vmem %s5, %s580
        // Predicated region
        $region45: #{tpu_custom_call.1} parent=35 // pred_check
          %p582 = pneg %p163
        $region46: #{tpu_custom_call.1} parent=35 // pred_check_branch
          %584 = sbr.rel (%p582) target = $region48
        $region47: #{tpu_custom_call.1} parent=35 // pred_region
          %s585 = sadd.s32 %s25, %s27
          %s587 = ssub.s32 256, 256
          %588 = vsyncadd %s569, %s587
          %s589 = smul.addr %s26, 4
          %s590 = sadd.s32 %s585, %s589
          %s591 = smul.addr %s590, 64
          %s592 = scalar_lea.hbm %s4, %s591
          %s593 = sshll.u32 %s572, 4
          %s594 = int_to_ptr.vmem [resolvable:$true] %s593
          %599 = dma.vmem_to_hbm [thread:$0]  %s594, 256, %s592, %s569, 64, 64, 4
        $region48: #{tpu_custom_call.1} parent=35 // pred_fallthru
          _
        // Predicated region
        $region49: #{tpu_custom_call.1} parent=35 // pred_check
          %p600 = pneg %p191
        $region50: #{tpu_custom_call.1} parent=35 // pred_check_branch
          %602 = sbr.rel (%p600) target = $region52
        $region51: #{tpu_custom_call.1} parent=35 // pred_region
          _
        $region52: #{tpu_custom_call.1} parent=35 // pred_fallthru
          _
      $region36: #{tpu_custom_call.1} parent=5 // pred_fallthru
        _
      %p603 = scmp.le.s32.totalorder 2, %s15
      // Predicated region
      $region53: #{tpu_custom_call.1} parent=5 // pred_check
        %p604 = pneg %p603
      $region54: #{tpu_custom_call.1} parent=5 // pred_check_branch
        %606 = sbr.rel (%p604) target = $region56
      $region55: #{tpu_custom_call.1} parent=5 // pred_region
        %s607 = ssub.s32 %s15, 2
        // Predicated region
        $region57: #{tpu_custom_call.1} parent=55 // pred_check
          %p608 = pneg %p169
        $region58: #{tpu_custom_call.1} parent=55 // pred_check_branch
          %610 = sbr.rel (%p608) target = $region60
        $region59: #{tpu_custom_call.1} parent=55 // pred_region
          %s611 = sand.u32 %s154, 1
          %s612 = scalar_lea.sflag [#allocation5], %s611
          %s613 = sand.u32 %s154, 1
          %s614 = smul.addr %s613, 16
          %s615 = scalar_lea.vmem [#allocation4], %s614
          %616 = dma.done %s612, 256
        $region60: #{tpu_custom_call.1} parent=55 // pred_fallthru
          _
        // Predicated region
        $region61: #{tpu_custom_call.1} parent=55 // pred_check
          %p617 = pneg %p197
        $region62: #{tpu_custom_call.1} parent=55 // pred_check_branch
          %619 = sbr.rel (%p617) target = $region64
        $region63: #{tpu_custom_call.1} parent=55 // pred_region
          %p620 = scmp.lt.s32.totalorder %s28, 0
          %s621 = scalar_select %p620, %s28, 0
          %p622 = scmp.lt.s32.totalorder %s29, 1
          %s623 = scalar_select %p622, %s29, 1
          %s624 = smul.addr %s623, 4
          %s625 = smul.addr %s621, 8
          %s626 = sadd.s32 %s624, %s625
          %s627 = smul.addr %s626, 8
          %s628 = scalar_lea.vmem %s5, %s627
        $region64: #{tpu_custom_call.1} parent=55 // pred_fallthru
          _
      $region56: #{tpu_custom_call.1} parent=5 // pred_fallthru
        _
    $region6: #{tpu_custom_call.1} parent=1 // loop_footer
      %s19 = sadd.s32 1, %s15
    $region7: #{tpu_custom_call.1} parent=1 // loop_footer_branch
      %14 = sbr.rel target = $region3
    $region8: #{tpu_custom_call.1} parent=1 // loop_exit
      _
    %629 = vsyncpa [#allocation5], 1
    %s630 = scalar_lea.sflag [#allocation5], 1
    %631 = vsyncpa %s630, 1

</llo_original>
